<compile_context>
chip_gen: v6e
topology: v6e:2x2x1
jax: 0.10.0
libtpu: 0.0.40
codegen_flags: <defaults>
</compile_context>

<pallas_src>
from functools import partial

import jax
import jax.numpy as jnp
from jax.experimental import pallas as pl
from jax.experimental.pallas import tpu as pltpu


SMOOTHING = 0.1
CONFIDENCE = 1.0 - SMOOTHING


def _label_smoothing_kernel(x_ref, t_ref, out_ref, *, n_rows, tile_n,
                            confidence, smoothing):
    # x_ref: (tile_n, C) logits tile, t_ref: (tile_n, 1) int32 targets,
    # out_ref: (1, 1) f32 accumulator resident in SMEM across all grid steps.
    i = pl.program_id(0)

    @pl.when(i == 0)
    def _init():
        out_ref[0, 0] = jnp.float32(0.0)

    x = x_ref[...].astype(jnp.float32)                 # (tile_n, C)
    tn, c = x.shape

    # Mask rows past the true batch size (partial last tile): zero the data so
    # max/exp stay finite, and zero the per-row loss contribution below.
    row_ids = i * tile_n + jax.lax.broadcasted_iota(jnp.int32, (tn, 1), 0)
    valid = row_ids < n_rows                           # (tile_n, 1) bool
    x = jnp.where(valid, x, 0.0)

    # Stable log-sum-exp pieces of log_softmax (logprobs = shifted - lse).
    m = jnp.max(x, axis=-1, keepdims=True)             # (tile_n, 1)
    shifted = x - m                                    # (tile_n, C)
    lse = jnp.log(jnp.sum(jnp.exp(shifted), axis=-1, keepdims=True))  # (tile_n,1)

    # Fused weighted gather: w = confidence * onehot(target) + smoothing / C.
    # Then  confidence*nll + smoothing*smooth  ==  lse - sum(shifted * w).
    tgt = t_ref[...]                                   # (tile_n, 1) int32
    col = jax.lax.broadcasted_iota(jnp.int32, (tn, c), 1)
    uni = jnp.float32(smoothing / c)
    w = jnp.where(col == tgt, jnp.float32(confidence) + uni, uni)
    weighted = jnp.sum(shifted * w, axis=-1, keepdims=True)           # (tile_n,1)

    loss_rows = jnp.where(valid, lse - weighted, 0.0)  # (tile_n, 1)
    out_ref[0, 0] += jnp.sum(loss_rows)

    @pl.when(i == pl.num_programs(0) - 1)
    def _finalize():
        out_ref[0, 0] = out_ref[0, 0] * jnp.float32(1.0 / n_rows)


def _pick_tile_n(n, c, itemsize):
    # Keep one x tile around <=2 MiB so double-buffering plus the few
    # (tile_n, C) f32 temporaries fit comfortably inside the smallest scoped
    # VMEM budget across generations (v7x 64 MiB physical, v5e 16 MiB default).
    budget_bytes = 2 * 1024 * 1024
    t = max(8, budget_bytes // max(1, c * itemsize))
    if t >= n:
        return n
    return max(8, (t // 8) * 8)


def label_smoothing_loss(x, target, smoothing=SMOOTHING, tile_n=None):
    """x: [N, C] float logits (f32 or bf16), target: [N] int class indices.

    Returns the scalar label-smoothed NLL loss (f32), matching
    LabelSmoothing(smoothing).forward(x, target).
    """
    n, c = x.shape
    if tile_n is None:
        tile_n = _pick_tile_n(n, c, jnp.dtype(x.dtype).itemsize)
    grid = (pl.cdiv(n, tile_n),)
    t2d = target.astype(jnp.int32).reshape(n, 1)

    kernel = partial(
        _label_smoothing_kernel,
        n_rows=n,
        tile_n=tile_n,
        confidence=1.0 - smoothing,
        smoothing=smoothing,
    )

    out = pl.pallas_call(
        kernel,
        out_shape=jax.ShapeDtypeStruct((1, 1), jnp.float32),
        grid=grid,
        in_specs=[
            pl.BlockSpec((tile_n, c), lambda i: (i, 0)),
            pl.BlockSpec((tile_n, 1), lambda i: (i, 0)),
        ],
        # Scalar accumulator: untiled (1,1) output resident in SMEM.
        out_specs=pl.BlockSpec(memory_space=pltpu.MemorySpace.SMEM),
        compiler_params=pltpu.CompilerParams(
            # Reduction axis over row tiles -> sequential accumulation.
            dimension_semantics=("arbitrary",),
            vmem_limit_bytes=32 * 1024 * 1024,
        ),
    )(x, t2d)
    return out[0, 0]


def _reference(x, target, smoothing=SMOOTHING):
    confidence = 1.0 - smoothing
    logprobs = jax.nn.log_softmax(x.astype(jnp.float32), axis=-1)
    nll = -jnp.take_along_axis(
        logprobs, target[:, None].astype(jnp.int32), axis=-1)[:, 0]
    smooth = -jnp.mean(logprobs, axis=-1)
    return jnp.mean(confidence * nll + smoothing * smooth)


if __name__ == "__main__":
    key = jax.random.PRNGKey(0)

    # Case 1: N divisible by the tile -> grid of 2, exercises accumulation.
    k1, k2, k3, k4 = jax.random.split(key, 4)
    N1, C = 16, 10
    x1 = jax.random.normal(k1, (N1, C), dtype=jnp.float32)
    t1 = jax.random.randint(k2, (N1,), 0, C, dtype=jnp.int32)
    loss1 = label_smoothing_loss(x1, t1, tile_n=8)
    jax.block_until_ready(loss1)
    ref1 = _reference(x1, t1)
    assert jnp.allclose(loss1, ref1, atol=1e-5, rtol=1e-5), (loss1, ref1)

    # Case 2: partial last tile (N=12, tile_n=8) -> exercises row masking.
    N2 = 12
    x2 = jax.random.normal(k3, (N2, C), dtype=jnp.float32)
    t2 = jax.random.randint(k4, (N2,), 0, C, dtype=jnp.int32)
    loss2 = label_smoothing_loss(x2, t2, tile_n=8)
    jax.block_until_ready(loss2)
    ref2 = _reference(x2, t2)
    assert jnp.allclose(loss2, ref2, atol=1e-5, rtol=1e-5), (loss2, ref2)

    print("KERNEL_OK")
</pallas_src>

<mosaic_0001>
module attributes {stable_mosaic.version = 11 : i64} {
  func.func @_label_smoothing_kernel(%arg0: i32, %arg1: memref<8x10xf32, #tpu.memory_space<vmem>>, %arg2: memref<8x1xi32, #tpu.memory_space<vmem>>, %arg3: memref<1x1xf32, #tpu.memory_space<smem>>) attributes {dimension_semantics = [#tpu.dimension_semantics<arbitrary>], iteration_bounds = array<i64: 2>, scalar_prefetch = 0 : i64, scratch_operands = 0 : i64, tpu.core_type = #tpu.core_type<tc>, window_params = [{transform_indices = @transform_0, window_bounds = array<i64: 8, 10>}, {transform_indices = @transform_1, window_bounds = array<i64: 8, 1>}, {transform_indices = @transform_2, window_bounds = array<i64: 1, 1>}]} {
    %c0_i32 = arith.constant 0 : i32
    %0 = arith.cmpi eq, %arg0, %c0_i32 : i32
    %1 = arith.extui %0 : i1 to i32
    %c0_i32_0 = arith.constant 0 : i32
    %2 = arith.cmpi ne, %1, %c0_i32_0 : i32
    scf.if %2 {
      %cst_17 = arith.constant 0.000000e+00 : f32
      %c0_18 = arith.constant 0 : index
      %c0_19 = arith.constant 0 : index
      %46 = memref.load %arg3[%c0_18, %c0_19] : memref<1x1xf32, #tpu.memory_space<smem>>
      memref.store %cst_17, %arg3[%c0_18, %c0_19] : memref<1x1xf32, #tpu.memory_space<smem>>
    } else {
    }
    %c0 = arith.constant 0 : index
    %c0_1 = arith.constant 0 : index
    %3 = vector.load %arg1[%c0, %c0_1] : memref<8x10xf32, #tpu.memory_space<vmem>>, vector<8x10xf32>
    %c8_i32 = arith.constant 8 : i32
    %4 = arith.muli %arg0, %c8_i32 : i32
    %5 = tpu.iota {dimensions = array<i32: 0>} : vector<8x1xi32>
    %6 = vector.broadcast %4 : i32 to vector<8x1xi32>
    %7 = arith.addi %6, %5 : vector<8x1xi32>
    %c16_i32 = arith.constant 16 : i32
    %8 = vector.broadcast %c16_i32 : i32 to vector<8x1xi32>
    %9 = arith.cmpi slt, %7, %8 : vector<8x1xi32>
    %cst = arith.constant 0.000000e+00 : f32
    %10 = vector.shape_cast %9 : vector<8x1xi1> to vector<8x1xi1>
    %11 = vector.broadcast %10 : vector<8x1xi1> to vector<8x10xi1>
    %12 = vector.broadcast %cst : f32 to vector<8x10xf32>
    %13 = arith.select %11, %3, %12 : vector<8x10xi1>, vector<8x10xf32>
    %cst_2 = arith.constant dense<0xFF800000> : vector<8xf32>
    %14 = vector.multi_reduction <maximumf>, %13, %cst_2 [1] : vector<8x10xf32> to vector<8xf32>
    %15 = vector.shape_cast %14 : vector<8xf32> to vector<8x1xf32>
    %16 = vector.broadcast %15 : vector<8x1xf32> to vector<8x10xf32>
    %17 = arith.subf %13, %16 : vector<8x10xf32>
    %18 = math.exp %17 : vector<8x10xf32>
    %cst_3 = arith.constant dense<0.000000e+00> : vector<8xf32>
    %19 = vector.multi_reduction <add>, %18, %cst_3 [1] : vector<8x10xf32> to vector<8xf32>
    %20 = vector.shape_cast %19 : vector<8xf32> to vector<8x1xf32>
    %21 = math.log %20 : vector<8x1xf32>
    %c0_4 = arith.constant 0 : index
    %c0_5 = arith.constant 0 : index
    %22 = vector.load %arg2[%c0_4, %c0_5] : memref<8x1xi32, #tpu.memory_space<vmem>>, vector<8x1xi32>
    %23 = tpu.iota {dimensions = array<i32: 1>} : vector<8x10xi32>
    %24 = vector.broadcast %22 : vector<8x1xi32> to vector<8x10xi32>
    %25 = arith.cmpi eq, %23, %24 : vector<8x10xi32>
    %cst_6 = arith.constant 0.899999976 : f32
    %cst_7 = arith.constant 0.00999999977 : f32
    %26 = arith.addf %cst_6, %cst_7 : f32
    %cst_8 = arith.constant 0.00999999977 : f32
    %27 = vector.broadcast %26 : f32 to vector<8x10xf32>
    %28 = vector.broadcast %cst_8 : f32 to vector<8x10xf32>
    %29 = arith.select %25, %27, %28 : vector<8x10xi1>, vector<8x10xf32>
    %30 = arith.mulf %17, %29 : vector<8x10xf32>
    %cst_9 = arith.constant dense<0.000000e+00> : vector<8xf32>
    %31 = vector.multi_reduction <add>, %30, %cst_9 [1] : vector<8x10xf32> to vector<8xf32>
    %32 = vector.shape_cast %31 : vector<8xf32> to vector<8x1xf32>
    %33 = arith.subf %21, %32 : vector<8x1xf32>
    %cst_10 = arith.constant 0.000000e+00 : f32
    %34 = vector.broadcast %cst_10 : f32 to vector<8x1xf32>
    %35 = arith.select %9, %33, %34 : vector<8x1xi1>, vector<8x1xf32>
    %c0_11 = arith.constant 0 : index
    %c0_12 = arith.constant 0 : index
    %36 = memref.load %arg3[%c0_11, %c0_12] : memref<1x1xf32, #tpu.memory_space<smem>>
    %37 = vector.shape_cast %35 : vector<8x1xf32> to vector<1x8x1xf32>
    %cst_13 = arith.constant dense<0.000000e+00> : vector<1xf32>
    %38 = vector.multi_reduction <add>, %37, %cst_13 [1, 2] : vector<1x8x1xf32> to vector<1xf32>
    %39 = vector.shape_cast %38 : vector<1xf32> to vector<1x1x1xf32>
    %40 = vector.extract %39[0, 0, 0] : f32 from vector<1x1x1xf32>
    %41 = arith.addf %36, %40 : f32
    %c0_14 = arith.constant 0 : index
    %c0_15 = arith.constant 0 : index
    %42 = memref.load %arg3[%c0_14, %c0_15] : memref<1x1xf32, #tpu.memory_space<smem>>
    memref.store %41, %arg3[%c0_14, %c0_15] : memref<1x1xf32, #tpu.memory_space<smem>>
    %c1_i32 = arith.constant 1 : i32
    %43 = arith.cmpi eq, %arg0, %c1_i32 : i32
    %44 = arith.extui %43 : i1 to i32
    %c0_i32_16 = arith.constant 0 : i32
    %45 = arith.cmpi ne, %44, %c0_i32_16 : i32
    scf.if %45 {
      %c0_17 = arith.constant 0 : index
      %c0_18 = arith.constant 0 : index
      %46 = memref.load %arg3[%c0_17, %c0_18] : memref<1x1xf32, #tpu.memory_space<smem>>
      %cst_19 = arith.constant 6.250000e-02 : f32
      %47 = arith.mulf %46, %cst_19 : f32
      %c0_20 = arith.constant 0 : index
      %c0_21 = arith.constant 0 : index
      %48 = memref.load %arg3[%c0_20, %c0_21] : memref<1x1xf32, #tpu.memory_space<smem>>
      memref.store %47, %arg3[%c0_20, %c0_21] : memref<1x1xf32, #tpu.memory_space<smem>>
    } else {
    }
    return
  }
  func.func @transform_0(%arg0: i32) -> (i32, i32) {
    %c0_i32 = arith.constant 0 : i32
    %c0_i32_0 = arith.constant 0 : i32
    return %arg0, %c0_i32 : i32, i32
  }
  func.func @transform_1(%arg0: i32) -> (i32, i32) {
    %c0_i32 = arith.constant 0 : i32
    %c0_i32_0 = arith.constant 0 : i32
    return %arg0, %c0_i32 : i32, i32
  }
  func.func @transform_2(%arg0: i32) -> (i32, i32) {
    %c0_i32 = arith.constant 0 : i32
    %c0_i32_0 = arith.constant 0 : i32
    %c0_i32_1 = arith.constant 0 : i32
    return %c0_i32, %c0_i32_0 : i32, i32
  }
}

</mosaic_0001>

<llo_original>
// kernel: tpu_custom_call.1
$region0: #{tpu_custom_call.1}
  #allocation0 [shape = 'u32[]', space=smem, size = 0x4, offset = 0x4, fixed_abs, tag = 'smem constant byte address 0x4 - core index']
  #allocation1 [shape = 'u32[144,128]{1,0:T(1,128)}', space=vmem, size = 0x12000, scoped, tag = 'internal scratch']
  %s0 = inlined_call_operand.vmem [shape: f32[16,10], index: 0, kind: input, shape index: {}]
  %s1 = inlined_call_operand.vmem [shape: s32[16,1], index: 1, kind: input, shape index: {}]
  %s2 = inlined_call_operand.hbm [shape: f32[1,1], index: 2, kind: output, shape index: {}]
  %s3 = sld [smem:[#allocation0]]
  $region49: #{tpu_custom_call.1} parent=0
    _
  %s5 = ssub.s32 1, %s3
  %s6 = scalar_select 0, %s5, %s3
  $region1: #{tpu_custom_call.1} parent=0
    #allocation2 [shape = 'u8[512]{0}', space=smem, size = 0x200, scoped, tag = 'output window, operand 0, single buffered']
    #allocation3 [shape = 's32[2]{0}', space=sflag, size = 0x8, scoped, tag = 'scoped memory for tpu_custom_call.1']
    %7 = vsyncpa [#allocation3], 0
    loop: start=0, step=1, limit=4
    $region2: #{tpu_custom_call.1} parent=1 // loop_pre_header
      _
    $region3: #{tpu_custom_call.1} parent=1 // loop_header
      %s9 = sphi 0, %s13
      %p10 = scmp.ge.s32.totalorder %s9, 4
      %s19 = sphi 0, %s21
      %s22 = sphi 0, %s19
      %s23 = sphi 0, %s22
      %s39 = sphi 0, %s23
      %s45 = sphi 0, %s47
      %s48 = sphi 0, %s45
      %s49 = sphi 0, %s48
      %s65 = sphi 0, %s49
      %s69 = sphi 0, %s69
      %s71 = sphi 0, %s69
      %s72 = sphi 0, %s71
      %s86 = sphi 0, %s72
    $region4: #{tpu_custom_call.1} parent=1 // loop_header_branch
      %12 = sbr.rel (%p10) target = $region8
    $region5: #{tpu_custom_call.1} parent=1 // loop_body
      %s14 = ssub.s32 %s9, 1
      %s15 = ssub.s32 %s9, 2
      %s16 = sadd.s32 %s9, 1
      %s17 = ssub.s32 %s9, %s16
      %p18 = scmp.eq.s32.totalorder %s17, 0
      %s20 = sadd.s32 %s19, 1
      %s21 = scalar_select %p18, %s19, %s20
      %p24 = pneg %p18
      %p25 = scmp.eq.s32.totalorder %s9, 1
      %p26 = por %p24, %p25
      %p27 = scmp.ne.s32.totalorder %s19, %s22
      %p28 = scmp.eq.s32.totalorder %s9, 0
      %p29 = por %p27, %p28
      %p30 = scmp.ne.s32.totalorder %s19, %s22
      %p31 = scmp.eq.s32.totalorder %s14, 1
      %p32 = por %p30, %p31
      %p33 = scmp.ne.s32.totalorder %s22, %s23
      %p34 = scmp.eq.s32.totalorder %s14, 0
      %p35 = por %p33, %p34
      %p36 = scmp.ne.s32.totalorder %s22, %s23
      %p37 = scmp.eq.s32.totalorder %s15, 1
      %p38 = por %p36, %p37
      %p40 = scmp.ne.s32.totalorder %s23, %s39
      %p41 = scmp.eq.s32.totalorder %s15, 0
      %p42 = por %p40, %p41
      %s43 = ssub.s32 %s9, %s16
      %p44 = scmp.eq.s32.totalorder %s43, 0
      %s46 = sadd.s32 %s45, 1
      %s47 = scalar_select %p44, %s45, %s46
      %p50 = pneg %p44
      %p51 = scmp.eq.s32.totalorder %s9, 1
      %p52 = por %p50, %p51
      %p53 = scmp.ne.s32.totalorder %s45, %s48
      %p54 = scmp.eq.s32.totalorder %s9, 0
      %p55 = por %p53, %p54
      %p56 = scmp.ne.s32.totalorder %s45, %s48
      %p57 = scmp.eq.s32.totalorder %s14, 1
      %p58 = por %p56, %p57
      %p59 = scmp.ne.s32.totalorder %s48, %s49
      %p60 = scmp.eq.s32.totalorder %s14, 0
      %p61 = por %p59, %p60
      %p62 = scmp.ne.s32.totalorder %s48, %s49
      %p63 = scmp.eq.s32.totalorder %s15, 1
      %p64 = por %p62, %p63
      %p66 = scmp.ne.s32.totalorder %s49, %s65
      %p67 = scmp.eq.s32.totalorder %s15, 0
      %p68 = por %p66, %p67
      %s70 = sadd.s32 %s69, 1
      %p73 = scmp.eq.s32.totalorder %s9, 1
      %p74 = scmp.ne.s32.totalorder %s69, %s71
      %p75 = scmp.eq.s32.totalorder %s9, 0
      %p76 = por %p74, %p75
      %p77 = scmp.ne.s32.totalorder %s69, %s71
      %p78 = scmp.eq.s32.totalorder %s14, 1
      %p79 = por %p77, %p78
      %p80 = scmp.ne.s32.totalorder %s71, %s72
      %p81 = scmp.eq.s32.totalorder %s14, 0
      %p82 = por %p80, %p81
      %p83 = scmp.ne.s32.totalorder %s71, %s72
      %p84 = scmp.eq.s32.totalorder %s15, 1
      %p85 = por %p83, %p84
      %p87 = scmp.ne.s32.totalorder %s72, %s86
      %p88 = scmp.eq.s32.totalorder %s15, 0
      %p89 = por %p87, %p88
      %p90 = scmp.le.s32.totalorder 1, %s9
      %p91 = scmp.lt.s32.totalorder %s9, 3
      %p92 = pnand %p90, %p91
      %p93 = pneg %p92
      // Predicated region
      $region9: #{tpu_custom_call.1} parent=5 // pred_check
        _
      $region10: #{tpu_custom_call.1} parent=5 // pred_check_branch
        %95 = sbr.rel (%p92) target = $region12
      $region11: #{tpu_custom_call.1} parent=5 // pred_region
        %s96 = ssub.s32 %s9, 1
      $region12: #{tpu_custom_call.1} parent=5 // pred_fallthru
        _
      %p97 = scmp.lt.s32.totalorder %s9, 2
      // Predicated region
      $region13: #{tpu_custom_call.1} parent=5 // pred_check
        %p98 = pneg %p97
      $region14: #{tpu_custom_call.1} parent=5 // pred_check_branch
        %100 = sbr.rel (%p98) target = $region16
      $region15: #{tpu_custom_call.1} parent=5 // pred_region
        // Predicated region
        $region17: #{tpu_custom_call.1} parent=15 // pred_check
          %p101 = pneg %p29
        $region18: #{tpu_custom_call.1} parent=15 // pred_check_branch
          %103 = sbr.rel (%p101) target = $region20
        $region19: #{tpu_custom_call.1} parent=15 // pred_region
          %p104 = scmp.lt.s32.totalorder %s9, 1
          %s105 = scalar_select %p104, %s9, 1
          %s106 = smul.addr %s105, 8
          %s107 = scalar_lea.vmem %s0, %s106
        $region20: #{tpu_custom_call.1} parent=15 // pred_fallthru
          _
        // Predicated region
        $region21: #{tpu_custom_call.1} parent=15 // pred_check
          %p108 = pneg %p55
        $region22: #{tpu_custom_call.1} parent=15 // pred_check_branch
          %110 = sbr.rel (%p108) target = $region24
        $region23: #{tpu_custom_call.1} parent=15 // pred_region
          %p111 = scmp.lt.s32.totalorder %s9, 1
          %s112 = scalar_select %p111, %s9, 1
          %s113 = smul.addr %s112, 8
          %s114 = scalar_lea.vmem %s1, %s113
        $region24: #{tpu_custom_call.1} parent=15 // pred_fallthru
          _
      $region16: #{tpu_custom_call.1} parent=5 // pred_fallthru
        _
      %p115 = scmp.le.s32.totalorder 1, %s9
      %p116 = scmp.lt.s32.totalorder %s9, 3
      %p117 = pnand %p115, %p116
      %p118 = pneg %p117
      // Predicated region
      $region25: #{tpu_custom_call.1} parent=5 // pred_check
        _
      $region26: #{tpu_custom_call.1} parent=5 // pred_check_branch
        %120 = sbr.rel (%p117) target = $region28
      $region27: #{tpu_custom_call.1} parent=5 // pred_region
        %s121 = ssub.s32 %s9, 1
        %p122 = scmp.lt.s32.totalorder %s14, 1
        %s123 = scalar_select %p122, %s14, 1
        %s124 = smul.addr %s123, 8
        %s125 = scalar_lea.vmem %s0, %s124
        %p126 = pneg %p35
        %p127 = pneg %p32
        %p128 = scmp.lt.s32.totalorder %s14, 1
        %s129 = scalar_select %p128, %s14, 1
        %s130 = smul.addr %s129, 8
        %s131 = scalar_lea.vmem %s1, %s130
        %p132 = pneg %p61
        %p133 = pneg %p58
        %p134 = pneg %p82
        %p135 = pneg %p79
        %p136 = scmp.lt.s32.totalorder %s14, 1
        %s137 = scalar_select %p136, %s14, 1
        %s138 = smul.addr %s137, 8
        %s139 = scalar_lea.vmem %s0, %s138
        %p140 = scmp.lt.s32.totalorder %s14, 1
        %s141 = scalar_select %p140, %s14, 1
        %s142 = smul.addr %s141, 8
        %s143 = scalar_lea.vmem %s1, %s142
        %p144 = scmp.eq.s32.totalorder %s14, 0
        // Predicated region
        $region29: #{tpu_custom_call.1} parent=27 // pred_check
          %p145 = pneg %p144
        $region30: #{tpu_custom_call.1} parent=27 // pred_check_branch
          %147 = sbr.rel (%p145) target = $region32
        $region31: #{tpu_custom_call.1} parent=27 // pred_region
          %s148 = scalar_lea.smem [#allocation2], 0
          %149 = sst [smem:[%s148]] 0.0
        $region32: #{tpu_custom_call.1} parent=27 // pred_fallthru
          _
        %v150 = vld [vmem:[%s139] sm:$0xff]
        %s151 = smul.u32 %s14, 8
        %v152 = vlaneseq
        %v153 = vshrl.u32 %v152, 7
        %v154 = vstv %s151
        %v155 = vadd.s32 %v154, %v153
        %vm156 = vcmp.lt.s32.totalorder %v155, 16
        %v157 = vsel %vm156, 1, 0
        %vm158 = vcmp.eq.s32.totalorder %v157, 1
        %v159 = vsel %vm158, %v150, 0.0
        %vm160 = vcmask 80896
        %v161 = vsel %vm160, %v159, -inf
        %162 = vmax.xlane.f32.xlu0 %v161
        %v163 = vpop.xlane.xlu0 %162
        %v164 = vsub.f32 %v159, %v163
        %v165 = vmul.f32 %v164, 1.442695
        %v166 = vpow.pop %v165
        %v167 = vsel %vm160, %v166, 0.0
        %168 = vadd.xlane.f32.xlu0 %v167
        %v169 = vpop.xlane.xlu0 %168
        %v170 = vlog2.pop %v169
        %v171 = vmul.f32 %v170, 0.6931472
        %v172 = vld [vmem:[%s143] sm:$0xff]
        %v173 = vlaneseq
        %v174 = vand.u32 %v173, 127
        %175 = vset.pattern.permute.xlu0 0
        %176 = vperm.xlu0 %175, %v172
        %v177 = vpop.permute.xlu0 %176
        %vm178 = vcmp.eq.s32.totalorder %v174, %v177
        %v179 = vsel %vm178, 0.90999997, 0.01
        %v180 = vmul.f32 %v164, %v179
        %v181 = vsel %vm160, %v180, 0.0
        %182 = vadd.xlane.f32.xlu0 %v181
        %v183 = vpop.xlane.xlu0 %182
        %v184 = vsub.f32 %v171, %v183
        %v185 = vsel %vm156, %v184, 0.0
        %s186 = sld [smem:[#allocation2]]
        %vm187 = vcmask 7168
        %v188 = vsel %vm187, %v185, 0.0
        %189 = vadd.xlane.f32.xlu0 %v188
        %v190 = vpop.xlane.xlu0 %189
        %v191 = vrot.slane %v190, 4
        %v192 = vadd.f32 %v190, %v191
        %v193 = vrot.slane %v192, 2
        %v194 = vadd.f32 %v192, %v193
        %v195 = vrot.slane %v194, 1
        %v196 = vadd.f32 %v194, %v195
        %s197 = vtos %v196
        %s198 = sadd.f32 %s186, %s197
        %s199 = scalar_lea.smem [#allocation2], 0
        %200 = sst [smem:[%s199]] %s198
        %p201 = scmp.eq.s32.totalorder %s14, 1
        // Predicated region
        $region33: #{tpu_custom_call.1} parent=27 // pred_check
          %p202 = pneg %p201
        $region34: #{tpu_custom_call.1} parent=27 // pred_check_branch
          %204 = sbr.rel (%p202) target = $region36
        $region35: #{tpu_custom_call.1} parent=27 // pred_region
          %s205 = sld [smem:[#allocation2]]
          %s206 = smul.f32 %s205, 0.0625
          %207 = sst [smem:[%s199]] %s206
        $region36: #{tpu_custom_call.1} parent=27 // pred_fallthru
          _
        // Predicated region
        $region37: #{tpu_custom_call.1} parent=27 // pred_check
          %p208 = pneg %p79
        $region38: #{tpu_custom_call.1} parent=27 // pred_check_branch
          %210 = sbr.rel (%p208) target = $region40
        $region39: #{tpu_custom_call.1} parent=27 // pred_region
          %s212 = ssub.s32 16, 16
          %213 = vsyncadd [#allocation3], %s212
          %216 = dma.smem_to_hbm [#allocation2], 16, %s2, [#allocation3]
        $region40: #{tpu_custom_call.1} parent=27 // pred_fallthru
          _
        // Predicated region
        $region41: #{tpu_custom_call.1} parent=27 // pred_check
          %p217 = pneg %p79
        $region42: #{tpu_custom_call.1} parent=27 // pred_check_branch
          %219 = sbr.rel (%p217) target = $region44
        $region43: #{tpu_custom_call.1} parent=27 // pred_region
          %220 = dma.done [#allocation3], 16
        $region44: #{tpu_custom_call.1} parent=27 // pred_fallthru
          _
        %221 = sfence
      $region28: #{tpu_custom_call.1} parent=5 // pred_fallthru
        _
      %p222 = scmp.le.s32.totalorder 2, %s9
      // Predicated region
      $region45: #{tpu_custom_call.1} parent=5 // pred_check
        %p223 = pneg %p222
      $region46: #{tpu_custom_call.1} parent=5 // pred_check_branch
        %225 = sbr.rel (%p223) target = $region48
      $region47: #{tpu_custom_call.1} parent=5 // pred_region
        %s226 = ssub.s32 %s9, 2
      $region48: #{tpu_custom_call.1} parent=5 // pred_fallthru
        _
    $region6: #{tpu_custom_call.1} parent=1 // loop_footer
      %s13 = sadd.s32 1, %s9
    $region7: #{tpu_custom_call.1} parent=1 // loop_footer_branch
      %8 = sbr.rel target = $region3
    $region8: #{tpu_custom_call.1} parent=1 // loop_exit
      _
    %227 = vsyncpa [#allocation3], 1
    %s228 = scalar_lea.sflag [#allocation3], 1
    %229 = vsyncpa %s228, 1

</llo_original>
